<compile_context>
chip_gen: v5e
topology: v5e:2x2
jax: 0.10.0
libtpu: 0.0.40
codegen_flags: <defaults>
</compile_context>

<pallas_src>
import jax
import jax.numpy as jnp
from jax.experimental import pallas as pl
from jax.experimental.pallas import tpu as pltpu

D = 512  # hidden dim fixed by the module (fc02: 512 -> 1)


# --------------------------------------------------------------------------------------
# Kernel: per batch tile, one fused 512->1 affine + sigmoid scaling, lane-dense output.
# --------------------------------------------------------------------------------------
def retriever_v5_kernel(txt_ref, w_ref, b_ref, out_ref):
    """Q = 60 * sigmoid(txt @ w_all + b_all) - 20 for one batch tile.

    txt_ref: (TB, 512) f32  -- pipelined activation tile
    w_ref  : (8, 512)  f32  -- row 0 = folded weight (rows 1..7 zero), VMEM-resident
    b_ref  : (1, 1)    f32  -- folded bias, SMEM scalar
    out_ref: (1, TB)   f32  -- lane-dense Q row for this tile
    """
    # 'md,nd->mn' (rhs-transposed) matmul: the (8, TB) result lands with the batch dim on
    # lanes, so the store below is a full-width unmasked vst and the HBM writeback is
    # contiguous.  MXU work (M=8, K=512) is trivial and fully hidden under the txt DMA.
    q = jax.lax.dot_general(
        w_ref[...], txt_ref[...],
        dimension_numbers=(((1,), (1,)), ((), ())),
        preferred_element_type=jnp.float32)           # (8, TB); only row 0 is meaningful
    q = q[0:1, :] + b_ref[0, 0]                       # (1, TB)
    out_ref[...] = 60.0 * jax.nn.sigmoid(q) - 20.0


# --------------------------------------------------------------------------------------
# Parameters (torch nn.Linear shapes, transposed to (in, out)) and offline folding.
# --------------------------------------------------------------------------------------
def init_params(key):
    """Deterministic synthetic parameters mirroring the module's attention + fc02 layers.

    Q/K projections are generated for fidelity but are provably dead under seq-len 1 and
    are dropped during folding.
    """
    names = ["wq0", "wk0", "wv0", "wo0", "wq1", "wk1", "wv1", "wo1"]
    keys = jax.random.split(key, 2 * len(names) + 2)
    params = {}
    for idx, n in enumerate(names):
        params[n] = jax.random.normal(keys[2 * idx], (D, D), jnp.float32) * 0.02
        params["b" + n[1:]] = jax.random.normal(keys[2 * idx + 1], (1, D), jnp.float32) * 0.02
    params["w02"] = jax.random.normal(keys[-2], (D, 1), jnp.float32) * 0.02
    params["b02"] = jax.random.normal(keys[-1], (1, 1), jnp.float32) * 0.02
    return params


def fold_params(params):
    """Fold the entire affine chain (Attn0 value path, Attn1 value path, fc02) offline in f32."""
    hp = jax.lax.Precision.HIGHEST
    mm = lambda a, b: jnp.dot(a, b, precision=hp)
    # Seq-len 1 => softmax over a single key == 1 => attn(q, k, v) = (v @ Wv + bv) @ Wo + bo.
    w0 = mm(params["wv0"], params["wo0"])
    b0 = mm(params["bv0"], params["wo0"]) + params["bo0"]
    w1 = mm(params["wv1"], params["wo1"])
    b1 = mm(params["bv1"], params["wo1"]) + params["bo1"]
    # No nonlinearity before the sigmoid -> compose everything into one 512-vector + scalar.
    w_all = mm(mm(w0, w1), params["w02"])                          # (512, 1)
    b_all = mm(mm(b0, w1) + b1, params["w02"]) + params["b02"]     # (1, 1)
    w_row = jnp.zeros((8, D), jnp.float32).at[0, :].set(w_all[:, 0])   # MXU-friendly lhs
    return {"w": w_row, "b": b_all.astype(jnp.float32)}


def reference_forward(txt, params):
    """Pure-JAX f32 reference of get_Q + output scaling (softmax over one key == 1)."""
    hp = jax.lax.Precision.HIGHEST
    mm = lambda a, b: jnp.dot(a, b, precision=hp)
    env = mm(mm(txt, params["wv0"]) + params["bv0"], params["wo0"]) + params["bo0"]
    x = mm(mm(env, params["wv1"]) + params["bv1"], params["wo1"]) + params["bo1"]
    q = mm(x, params["w02"]) + params["b02"]
    return 60.0 * jax.nn.sigmoid(q) - 20.0


# --------------------------------------------------------------------------------------
# Wrapper
# --------------------------------------------------------------------------------------
def _round_up(x, m):
    return ((x + m - 1) // m) * m


def _batch_tile(B):
    """Batch tile: large enough to amortize the ~0.35 us grid-step overhead, >= 2 steps
    whenever B > 1024 (v7x megacore / pipelining), capped at 4096 rows (8 MiB f32 per tile,
    ~16 MiB double-buffered -- comfortably under every generation's VMEM budget)."""
    B8 = _round_up(B, 8)
    if B8 <= 1024:
        return B8
    if B8 <= 8192:
        return _round_up(pl.cdiv(B8, 2), 128)
    return 4096


def retriever_v5_forward(img, txt, action, hx, r, folded):
    """img, txt: (B, 512); action: (B, 1, 512); hx, r: Stage1 state / reward pass-through.

    img / action only feed the (dead) Q/K branches of the two length-1 attentions and
    hx / r never enter get_Q, so none of them participate in the kernel compute.
    """
    del img, action, hx, r
    B = txt.shape[0]
    TB = _batch_tile(B)
    G = pl.cdiv(B, TB)
    Bpad = G * TB
    if Bpad != B:
        # Keep every block fully in-bounds.  For aligned production batch sizes this is a
        # no-op; at B=2 it pads 6 zero rows whose Q values are sliced away below.
        txt = jnp.pad(txt, ((0, Bpad - B), (0, 0)))

    vmem = pltpu.MemorySpace.VMEM
    smem = pltpu.MemorySpace.SMEM
    out = pl.pallas_call(
        retriever_v5_kernel,
        out_shape=jax.ShapeDtypeStruct((G, TB), jnp.float32),
        grid=(G,),
        in_specs=[
            pl.BlockSpec((TB, D), lambda i: (i, 0), memory_space=vmem),  # txt tile (pipelined)
            pl.BlockSpec((8, D), lambda i: (0, 0), memory_space=vmem),   # folded weight (resident)
            pl.BlockSpec(memory_space=smem),                             # folded bias scalar
        ],
        out_specs=pl.BlockSpec((1, TB), lambda i: (i, 0), memory_space=vmem),
        compiler_params=pltpu.CompilerParams(
            # TODO(synk): on v7x, pltpu.CORE_PARALLEL here would split the batch tiles across
            # both TensorCores; kept as "parallel" for portability across generations.
            dimension_semantics=("parallel",),
            vmem_limit_bytes=32 << 20,
        ),
    )(txt, folded["w"], folded["b"])
    return out.reshape(Bpad, 1)[:B]  # (B, 1) Q-values in (-20, 40)


if __name__ == "__main__":
    key = jax.random.PRNGKey(0)
    kp, ki, kt, ka, kh = jax.random.split(key, 5)
    B = 2

    params = init_params(kp)
    folded = fold_params(params)

    # CLIP-style L2-normalized embeddings for img / txt / action.
    img = jax.random.normal(ki, (B, D), jnp.float32)
    img = img / jnp.linalg.norm(img, axis=-1, keepdims=True)
    txt = jax.random.normal(kt, (B, D), jnp.float32)
    txt = txt / jnp.linalg.norm(txt, axis=-1, keepdims=True)
    action = jax.random.normal(ka, (B, 1, D), jnp.float32)
    action = action / jnp.linalg.norm(action, axis=-1, keepdims=True)
    hx = jax.random.normal(kh, (B, D), jnp.float32)   # pass-through (Stage1 state)
    r = jnp.zeros((B, 1), jnp.float32)                # pass-through (unused in get_Q)

    q_vals = retriever_v5_forward(img, txt, action, hx, r, folded)
    jax.block_until_ready(q_vals)

    q_ref = reference_forward(txt, params)
    assert q_vals.shape == (B, 1)
    assert bool(jnp.all(jnp.isfinite(q_vals)))
    assert bool(jnp.all((q_vals > -20.0) & (q_vals < 40.0)))
    assert bool(jnp.allclose(q_vals, q_ref, atol=1e-3, rtol=1e-3)), (
        "max abs diff " + str(float(jnp.max(jnp.abs(q_vals - q_ref)))))
    print("KERNEL_OK")
</pallas_src>

<mosaic_0001>
module attributes {stable_mosaic.version = 11 : i64} {
  func.func @retriever_v5_kernel(%arg0: i32, %arg1: memref<8x512xf32, #tpu.memory_space<vmem>>, %arg2: memref<8x512xf32, #tpu.memory_space<vmem>>, %arg3: memref<1x1xf32, #tpu.memory_space<smem>>, %arg4: memref<1x8xf32, #tpu.memory_space<vmem>>) attributes {dimension_semantics = [#tpu.dimension_semantics<parallel>], iteration_bounds = array<i64: 1>, scalar_prefetch = 0 : i64, scratch_operands = 0 : i64, tpu.core_type = #tpu.core_type<tc>, window_params = [{transform_indices = @transform_0, window_bounds = array<i64: 8, 512>}, {pipeline_mode = #tpu.pipeline_mode<synchronous>, transform_indices = @transform_1, window_bounds = array<i64: 8, 512>}, {transform_indices = @transform_2, window_bounds = array<i64: 1, 1>}, {transform_indices = @transform_3, window_bounds = array<i64: 1, 8>}]} {
    %c0 = arith.constant 0 : index
    %c0_0 = arith.constant 0 : index
    %0 = vector.load %arg2[%c0, %c0_0] : memref<8x512xf32, #tpu.memory_space<vmem>>, vector<8x512xf32>
    %c0_1 = arith.constant 0 : index
    %c0_2 = arith.constant 0 : index
    %1 = vector.load %arg1[%c0_1, %c0_2] : memref<8x512xf32, #tpu.memory_space<vmem>>, vector<8x512xf32>
    %cst = arith.constant dense<0.000000e+00> : vector<8x8xf32>
    %2 = tpu.matmul %0, %1, %cst {dimension_numbers = #tpu.dot_dimension_numbers<[1], [1], [0], [0], [0, 0, 1, 0], [], []>} : vector<8x512xf32>, vector<8x512xf32>, vector<8x8xf32> -> vector<8x8xf32>
    %3 = vector.extract_strided_slice %2 {offsets = [0, 0], sizes = [1, 8], strides = [1, 1]} : vector<8x8xf32> to vector<1x8xf32>
    %c0_3 = arith.constant 0 : index
    %c0_4 = arith.constant 0 : index
    %4 = memref.load %arg3[%c0_3, %c0_4] : memref<1x1xf32, #tpu.memory_space<smem>>
    %5 = vector.broadcast %4 : f32 to vector<1x8xf32>
    %6 = arith.addf %3, %5 : vector<1x8xf32>
    %7 = arith.negf %6 : vector<1x8xf32>
    %8 = math.exp %7 : vector<1x8xf32>
    %cst_5 = arith.constant 1.000000e+00 : f32
    %9 = vector.broadcast %cst_5 : f32 to vector<1x8xf32>
    %10 = arith.addf %9, %8 : vector<1x8xf32>
    %11 = arith.divf %9, %10 : vector<1x8xf32>
    %cst_6 = arith.constant 6.000000e+01 : f32
    %12 = vector.broadcast %cst_6 : f32 to vector<1x8xf32>
    %13 = arith.mulf %12, %11 : vector<1x8xf32>
    %cst_7 = arith.constant 2.000000e+01 : f32
    %14 = vector.broadcast %cst_7 : f32 to vector<1x8xf32>
    %15 = arith.subf %13, %14 : vector<1x8xf32>
    %c0_8 = arith.constant 0 : index
    %c0_9 = arith.constant 0 : index
    %16 = vector.load %arg4[%c0_8, %c0_9] : memref<1x8xf32, #tpu.memory_space<vmem>>, vector<1x8xf32>
    tpu.vector_store %arg4[%c0_8, %c0_9], %15 {strides = array<i32>} : memref<1x8xf32, #tpu.memory_space<vmem>>, vector<1x8xf32>,
    return
  }
  func.func @transform_0(%arg0: i32) -> (i32, i32) {
    %c0_i32 = arith.constant 0 : i32
    %c0_i32_0 = arith.constant 0 : i32
    return %arg0, %c0_i32 : i32, i32
  }
  func.func @transform_1(%arg0: i32) -> (i32, i32) {
    %c0_i32 = arith.constant 0 : i32
    %c0_i32_0 = arith.constant 0 : i32
    %c0_i32_1 = arith.constant 0 : i32
    return %c0_i32, %c0_i32_0 : i32, i32
  }
  func.func @transform_2(%arg0: i32) -> (i32, i32) {
    %c0_i32 = arith.constant 0 : i32
    %c0_i32_0 = arith.constant 0 : i32
    %c0_i32_1 = arith.constant 0 : i32
    return %c0_i32, %c0_i32_0 : i32, i32
  }
  func.func @transform_3(%arg0: i32) -> (i32, i32) {
    %c0_i32 = arith.constant 0 : i32
    %c0_i32_0 = arith.constant 0 : i32
    return %arg0, %c0_i32 : i32, i32
  }
}

</mosaic_0001>

<llo_original>
// kernel: tpu_custom_call.1
$region0: #{tpu_custom_call.1}
  #allocation0 [shape = 'u32[]', space=smem, size = 0x4, offset = 0x4, fixed_abs, tag = 'smem constant byte address 0x4 - core index']
  #allocation1 [shape = 'u32[72,128]{1,0:T(1,128)}', space=vmem, size = 0x9000, scoped, tag = 'internal scratch']
  #allocation2 [shape = 'f32[1,1]{1,0:T(1,128)S(6)}', space=smem, size = 0x200, scoped, tag = 'scoped memory for tpu_custom_call.1']
  %s0 = inlined_call_operand.hbm [shape: f32[8,512], index: 0, kind: input, shape index: {}]
  %s1 = inlined_call_operand.hbm [shape: f32[8,512], index: 1, kind: input, shape index: {}]
  %s2 = inlined_call_operand.<no memory space> [shape: f32[1,1], index: 2, kind: input, shape index: {}]
  %s3 = inlined_call_operand.hbm [shape: f32[1,8], index: 3, kind: output, shape index: {}]
  %s4 = sld [smem:[#allocation0]]
  $region30: #{tpu_custom_call.1} parent=0
    _
  %s6 = ssub.s32 1, %s4
  %s7 = scalar_select 0, %s6, %s4
  %8 = sst [smem:[#allocation2]] %s2
  $region1: #{tpu_custom_call.1} parent=0
    #allocation3 [shape = 'u8[16384]{0}', space=vmem, size = 0x4000, scoped, tag = 'input window, operand 0, single buffered']
    #allocation4 [shape = 's32[1]{0}', space=sflag, size = 0x4, scoped, tag = 'scoped memory for tpu_custom_call.1']
    #allocation5 [shape = 's32[1]{0}', space=sflag, size = 0x4, scoped, tag = 'scoped memory for tpu_custom_call.1']
    #allocation6 [shape = 'u8[16384]{0}', space=vmem, size = 0x4000, scoped, tag = 'input window, operand 1, single buffered']
    #allocation7 [shape = 's32[1]{0}', space=sflag, size = 0x4, scoped, tag = 'scoped memory for tpu_custom_call.1']
    #allocation8 [shape = 'u8[512]{0}', space=vmem, size = 0x400, scoped, tag = 'output window, operand 0, single buffered']
    %9 = vsyncpa [#allocation4], 0
    %10 = vsyncpa [#allocation7], 0
    %11 = vsyncpa [#allocation5], 0
    // Predicated region
    $region2: #{tpu_custom_call.1} parent=1 // pred_check
      _
    $region3: #{tpu_custom_call.1} parent=1 // pred_check_branch
      %13 = sbr.rel (0) target = $region5
    $region4: #{tpu_custom_call.1} parent=1 // pred_region
      %15 = vsyncadd [#allocation4], 0
      %s17 = sshll.u32 %s0, 4
      %s18 = int_to_ptr.hbm [resolvable:$true] %s17
      %s19 = sshll.u32 [#allocation3], 4
      %s20 = int_to_ptr.vmem [resolvable:$true] %s19
      %22 = dma.hbm_to_vmem [thread:$0]  %s18, 512, %s20, [#allocation4]
    $region5: #{tpu_custom_call.1} parent=1 // pred_fallthru
      _
    // Predicated region
    $region6: #{tpu_custom_call.1} parent=1 // pred_check
      _
    $region7: #{tpu_custom_call.1} parent=1 // pred_check_branch
      %24 = sbr.rel (0) target = $region9
    $region8: #{tpu_custom_call.1} parent=1 // pred_region
      %26 = vsyncadd [#allocation7], 0
      %s28 = sshll.u32 %s1, 4
      %s29 = int_to_ptr.hbm [resolvable:$true] %s28
      %s30 = sshll.u32 [#allocation6], 4
      %s31 = int_to_ptr.vmem [resolvable:$true] %s30
      %33 = dma.hbm_to_vmem [thread:$0]  %s29, 512, %s31, [#allocation7]
    $region9: #{tpu_custom_call.1} parent=1 // pred_fallthru
      _
    // Predicated region
    $region10: #{tpu_custom_call.1} parent=1 // pred_check
      _
    $region11: #{tpu_custom_call.1} parent=1 // pred_check_branch
      %35 = sbr.rel (0) target = $region13
    $region12: #{tpu_custom_call.1} parent=1 // pred_region
      _
    $region13: #{tpu_custom_call.1} parent=1 // pred_fallthru
      _
    // Predicated region
    $region14: #{tpu_custom_call.1} parent=1 // pred_check
      _
    $region15: #{tpu_custom_call.1} parent=1 // pred_check_branch
      %37 = sbr.rel (0) target = $region17
    $region16: #{tpu_custom_call.1} parent=1 // pred_region
      %39 = dma.done [#allocation4], 512
    $region17: #{tpu_custom_call.1} parent=1 // pred_fallthru
      _
    // Predicated region
    $region18: #{tpu_custom_call.1} parent=1 // pred_check
      _
    $region19: #{tpu_custom_call.1} parent=1 // pred_check_branch
      %41 = sbr.rel (0) target = $region21
    $region20: #{tpu_custom_call.1} parent=1 // pred_region
      %43 = dma.done [#allocation7], 512
    $region21: #{tpu_custom_call.1} parent=1 // pred_fallthru
      _
    %v44 = vld [vmem:[#allocation6] sm:$0xff]
    %v45 = vld [vmem:[#allocation6 + $0x8] sm:$0xff]
    %v46 = vld [vmem:[#allocation6 + $0x10] sm:$0xff]
    %v47 = vld [vmem:[#allocation6 + $0x18] sm:$0xff]
    %v48 = vld [vmem:[#allocation3] sm:$0xff]
    %v49 = vld [vmem:[#allocation3 + $0x8] sm:$0xff]
    %v50 = vld [vmem:[#allocation3 + $0x10] sm:$0xff]
    %v51 = vld [vmem:[#allocation3 + $0x18] sm:$0xff]
    %52 = vmatpush.xpose.msra.mxu0 0.0
    %53 = vmatpush.xpose.msra.mxu0 0.0
    %54 = vmatpush.xpose.msra.mxu0 0.0
    %55 = vmatpush.xpose.msra.mxu0 0.0
    %56 = vmatpush.xpose.msra.mxu0 0.0
    %57 = vmatpush.xpose.msra.mxu0 0.0
    %58 = vmatpush.xpose.msra.mxu0 0.0
    %59 = vmatpush.xpose.msra.mxu0 0.0
    %60 = vmatpush.xpose.msra.mxu0 0.0
    %61 = vmatpush.xpose.msra.mxu0 0.0
    %62 = vmatpush.xpose.msra.mxu0 0.0
    %63 = vmatpush.xpose.msra.mxu0 0.0
    %64 = vmatpush.xpose.msra.mxu0 0.0
    %65 = vmatpush.xpose.msra.mxu0 0.0
    %66 = vmatpush.xpose.msra.mxu0 0.0
    %67 = vmatpush.xpose.msra.mxu0 %v48
    %68 = vmatmul.f32.gmra.mxu0 %v44
    %v69 = vpop.f32.mrf.mxu0
    %v70 = vadd.f32 0.0, %v69
    %71 = vdwg.mxu0
    %72 = vmatpush.xpose.msra.mxu0 0.0
    %73 = vmatpush.xpose.msra.mxu0 0.0
    %74 = vmatpush.xpose.msra.mxu0 0.0
    %75 = vmatpush.xpose.msra.mxu0 0.0
    %76 = vmatpush.xpose.msra.mxu0 0.0
    %77 = vmatpush.xpose.msra.mxu0 0.0
    %78 = vmatpush.xpose.msra.mxu0 0.0
    %79 = vmatpush.xpose.msra.mxu0 0.0
    %80 = vmatpush.xpose.msra.mxu0 0.0
    %81 = vmatpush.xpose.msra.mxu0 0.0
    %82 = vmatpush.xpose.msra.mxu0 0.0
    %83 = vmatpush.xpose.msra.mxu0 0.0
    %84 = vmatpush.xpose.msra.mxu0 0.0
    %85 = vmatpush.xpose.msra.mxu0 0.0
    %86 = vmatpush.xpose.msra.mxu0 0.0
    %87 = vmatpush.xpose.msra.mxu0 %v49
    %88 = vmatmul.f32.gmra.mxu0 %v45
    %v89 = vpop.f32.mrf.mxu0
    %v90 = vadd.f32 %v70, %v89
    %91 = vdwg.mxu0
    %92 = vmatpush.xpose.msra.mxu0 0.0
    %93 = vmatpush.xpose.msra.mxu0 0.0
    %94 = vmatpush.xpose.msra.mxu0 0.0
    %95 = vmatpush.xpose.msra.mxu0 0.0
    %96 = vmatpush.xpose.msra.mxu0 0.0
    %97 = vmatpush.xpose.msra.mxu0 0.0
    %98 = vmatpush.xpose.msra.mxu0 0.0
    %99 = vmatpush.xpose.msra.mxu0 0.0
    %100 = vmatpush.xpose.msra.mxu0 0.0
    %101 = vmatpush.xpose.msra.mxu0 0.0
    %102 = vmatpush.xpose.msra.mxu0 0.0
    %103 = vmatpush.xpose.msra.mxu0 0.0
    %104 = vmatpush.xpose.msra.mxu0 0.0
    %105 = vmatpush.xpose.msra.mxu0 0.0
    %106 = vmatpush.xpose.msra.mxu0 0.0
    %107 = vmatpush.xpose.msra.mxu0 %v50
    %108 = vmatmul.f32.gmra.mxu0 %v46
    %v109 = vpop.f32.mrf.mxu0
    %v110 = vadd.f32 %v90, %v109
    %111 = vdwg.mxu0
    %112 = vmatpush.xpose.msra.mxu0 0.0
    %113 = vmatpush.xpose.msra.mxu0 0.0
    %114 = vmatpush.xpose.msra.mxu0 0.0
    %115 = vmatpush.xpose.msra.mxu0 0.0
    %116 = vmatpush.xpose.msra.mxu0 0.0
    %117 = vmatpush.xpose.msra.mxu0 0.0
    %118 = vmatpush.xpose.msra.mxu0 0.0
    %119 = vmatpush.xpose.msra.mxu0 0.0
    %120 = vmatpush.xpose.msra.mxu0 0.0
    %121 = vmatpush.xpose.msra.mxu0 0.0
    %122 = vmatpush.xpose.msra.mxu0 0.0
    %123 = vmatpush.xpose.msra.mxu0 0.0
    %124 = vmatpush.xpose.msra.mxu0 0.0
    %125 = vmatpush.xpose.msra.mxu0 0.0
    %126 = vmatpush.xpose.msra.mxu0 0.0
    %127 = vmatpush.xpose.msra.mxu0 %v51
    %128 = vmatmul.f32.gmra.mxu0 %v47
    %v129 = vpop.f32.mrf.mxu0
    %v130 = vadd.f32 %v110, %v129
    %131 = vdwg.mxu0
    %s132 = sld [smem:[#allocation2]]
    %v133 = vstv %s132
    %v134 = vadd.f32 %v130, %v133
    %v135 = vxor.u32 %v134, 2147483648
    %v136 = vmul.f32 %v135, 1.442695
    %v137 = vpow.pop %v136
    %v138 = vadd.f32 %v137, 1.0
    %v139 = vrcp.pop %v138
    %v140 = vmul.f32 %v138, %v139
    %v141 = vsub.f32 1.0, %v140
    %v142 = vmul.f32 %v139, %v141
    %v143 = vadd.f32 %v139, %v142
    %vm144 = vweird.f32 %v138
    %vm145 = vweird.f32 %v139
    %vm146 = vmor %vm144, %vm145
    %v147 = vsel %vm146, %v139, %v143
    %v148 = vand.u32 2147483647, %v138
    %vm149 = vcmp.eq.f32.partialorder %v148, 8.507059e+37
    %v150 = vand.u32 %v138, 2147483648
    %v151 = vor.u32 1.1754944e-38, %v150
    %v152 = vsel %vm149, %v151, %v147
    %v153 = vmul.f32 1.0, %v152
    %v154 = vmul.f32 %v153, 60.0
    %v155 = vsub.f32 %v154, 20.0
    %vm156 = vcmask 57344
    %157 = vst.msk [vmem:[#allocation8] sm:$0x1] %vm156, %v155
    // Predicated region
    $region22: #{tpu_custom_call.1} parent=1 // pred_check
      _
    $region23: #{tpu_custom_call.1} parent=1 // pred_check_branch
      %159 = sbr.rel (0) target = $region25
    $region24: #{tpu_custom_call.1} parent=1 // pred_region
      %161 = vsyncadd [#allocation5], 0
      %s163 = sshll.u32 [#allocation8], 4
      %s164 = int_to_ptr.vmem [resolvable:$true] %s163
      %s165 = sshll.u32 %s3, 4
      %s166 = int_to_ptr.hbm [resolvable:$true] %s165
      %168 = dma.vmem_to_hbm [thread:$0]  %s164, 16, %s166, [#allocation5]
    $region25: #{tpu_custom_call.1} parent=1 // pred_fallthru
      _
    // Predicated region
    $region26: #{tpu_custom_call.1} parent=1 // pred_check
      _
    $region27: #{tpu_custom_call.1} parent=1 // pred_check_branch
      %170 = sbr.rel (0) target = $region29
    $region28: #{tpu_custom_call.1} parent=1 // pred_region
      %172 = dma.done [#allocation5], 16
    $region29: #{tpu_custom_call.1} parent=1 // pred_fallthru
      _
    %173 = vsyncpa [#allocation4], 1
    %174 = vsyncpa [#allocation7], 1
    %175 = vsyncpa [#allocation5], 1

</llo_original>
